<compile_context>
chip_gen: v7x
topology: tpu7x:2x2x1
jax: 0.10.0
libtpu: 0.0.40
codegen_flags: <defaults>
</compile_context>

<pallas_src>
import functools
import math

import jax
import jax.numpy as jnp
from jax.experimental import pallas as pl
from jax.experimental.pallas import tpu as pltpu


def eca_kernel_size(channels, gamma=2, b=1):
    """kernel_size formula from the PyTorch ECABlock.__init__."""
    k = int(abs((math.log(channels, 2) + b) / gamma))
    return k if k % 2 else k + 1


def _round_up(x, m):
    return ((x + m - 1) // m) * m


def _vmem_limit_bytes():
    """~75% of this generation's per-core VMEM, capped at 100 MiB."""
    try:
        cap = int(pltpu.get_tpu_info().vmem_capacity_bytes)
    except Exception:
        cap = 64 << 20                       # conservative (v7x-sized) fallback
    return int(min(cap * 3 // 4, 100 << 20))


# ---------------------------------------------------------------------------
# In-kernel k-tap channel conv (taps from SMEM) + sigmoid on pooled vector.
# ---------------------------------------------------------------------------
def _conv_sigmoid(y, taps_ref, ksize):
    # y: (C, 1) f32 pooled means.  out[c] = sigmoid(sum_j w[j] * y[c + j - p]).
    # XLU sublane rolls + boundary masks + VPU MACs: no MXU, no weight DMA.
    C = y.shape[0]
    p = (ksize - 1) // 2
    ch = jax.lax.broadcasted_iota(jnp.int32, (C, 1), 0)
    acc = jnp.zeros((C, 1), jnp.float32)
    for j in range(ksize):                                 # static unroll, k <= 9
        off = j - p
        shifted = y if off == 0 else pltpu.roll(y, shift=(-off) % C, axis=0)
        valid = jnp.logical_and(ch + off >= 0, ch + off < C)
        acc = acc + taps_ref[j] * jnp.where(valid, shifted, 0.0)
    return jax.nn.sigmoid(acc)


# ---------------------------------------------------------------------------
# Fused single-pass kernel: pool -> conv -> sigmoid -> scale (1 read, 1 write)
# ---------------------------------------------------------------------------
def _eca_fused_kernel(taps_ref, x_ref, o_ref, *, ksize, inv_hw):
    x = x_ref[0]                                           # (Cp, HWp) native dtype
    pooled = jnp.sum(x, axis=1, keepdims=True, dtype=jnp.float32) * inv_hw
    a = _conv_sigmoid(pooled, taps_ref, ksize)             # (Cp, 1) f32
    o_ref[0] = x * a.astype(o_ref.dtype)                   # broadcast over lanes


# ---------------------------------------------------------------------------
# Tiled two-pass kernels (used when the fused block would blow VMEM)
# ---------------------------------------------------------------------------
def _eca_pool_kernel(taps_ref, x_ref, att_ref, *, ksize, inv_hw):
    t = pl.program_id(1)

    @pl.when(t == 0)
    def _():
        att_ref[...] = jnp.zeros_like(att_ref)

    att_ref[0] = att_ref[0] + jnp.sum(
        x_ref[0], axis=1, keepdims=True, dtype=jnp.float32)

    @pl.when(t == pl.num_programs(1) - 1)
    def _():
        att_ref[0] = _conv_sigmoid(att_ref[0] * inv_hw, taps_ref, ksize)


def _eca_scale_kernel(att_ref, x_ref, o_ref):
    o_ref[0] = x_ref[0] * att_ref[0].astype(o_ref.dtype)


# ---------------------------------------------------------------------------
# Wrapper
# ---------------------------------------------------------------------------
def eca_block(x_nchw, taps, *, max_fused_bytes=None, tile_lanes=None):
    """ECABlock forward. x_nchw: (B, C, H, W); taps: (k,) Conv1d weights."""
    B, C, H, W = x_nchw.shape
    HW = H * W
    ksize = int(taps.shape[0])
    itemsize = jnp.dtype(x_nchw.dtype).itemsize
    inv_hw = 1.0 / float(HW)                               # true HW, not padded
    limit = _vmem_limit_bytes()

    # Pad channels to a multiple of 8 (sublanes) and lanes to a multiple of 128
    # so stores are unmasked and the channel roll never sees layout padding.
    Cp = _round_up(C, 8)
    HWp = _round_up(HW, 128)

    xf = x_nchw.reshape(B, C, HW)                          # free reshape (NCHW)
    taps_f32 = taps.astype(jnp.float32)
    smem_spec = pl.BlockSpec(memory_space=pltpu.MemorySpace.SMEM)

    fused_bytes = 4 * Cp * HWp * itemsize                  # double-buffered in+out
    threshold = int(limit * 0.9) if max_fused_bytes is None else int(max_fused_bytes)

    if fused_bytes <= threshold:
        # ---- fully fused: x read from HBM once, written once ----
        if (Cp, HWp) != (C, HW):
            xf = jnp.pad(xf, ((0, 0), (0, Cp - C), (0, HWp - HW)))
        blk = pl.BlockSpec((1, Cp, HWp), lambda b: (b, 0, 0))
        out = pl.pallas_call(
            functools.partial(_eca_fused_kernel, ksize=ksize, inv_hw=inv_hw),
            out_shape=jax.ShapeDtypeStruct((B, Cp, HWp), x_nchw.dtype),
            grid=(B,),
            in_specs=[smem_spec, blk],
            out_specs=blk,
            compiler_params=pltpu.CompilerParams(
                dimension_semantics=("parallel",),
                vmem_limit_bytes=limit),
            cost_estimate=pl.CostEstimate(
                flops=2 * B * Cp * HWp,
                bytes_accessed=2 * B * Cp * HWp * itemsize,
                transcendentals=B * Cp),
        )(taps_f32, xf)
    else:
        # ---- tiled two-pass (large maps / v7x 64 MiB VMEM): 1.5x HBM traffic,
        #      but every per-step tile fits the VMEM budget. ----
        if tile_lanes is None:
            t_budget = max(128, limit // (4 * Cp * itemsize))
            T = min(max(t_budget, 512), 8192, HWp)
        else:
            T = min(int(tile_lanes), HWp)
        T = max(128, (T // 128) * 128)
        HWp = _round_up(HW, T)
        if (Cp, HWp) != (C, HW):
            xf = jnp.pad(xf, ((0, 0), (0, Cp - C), (0, HWp - HW)))
        num_t = HWp // T

        # Pass 1: pooled sum accumulated across lane tiles -> conv -> sigmoid.
        att = pl.pallas_call(
            functools.partial(_eca_pool_kernel, ksize=ksize, inv_hw=inv_hw),
            out_shape=jax.ShapeDtypeStruct((B, Cp, 1), jnp.float32),
            grid=(B, num_t),
            in_specs=[smem_spec,
                      pl.BlockSpec((1, Cp, T), lambda b, t: (b, 0, t))],
            out_specs=pl.BlockSpec((1, Cp, 1), lambda b, t: (b, 0, 0)),
            compiler_params=pltpu.CompilerParams(
                dimension_semantics=("parallel", "arbitrary"),
                vmem_limit_bytes=limit),
            cost_estimate=pl.CostEstimate(
                flops=B * Cp * HWp,
                bytes_accessed=B * Cp * HWp * itemsize,
                transcendentals=B * Cp),
        )(taps_f32, xf)

        # Pass 2: stream lane tiles again and scale (both axes parallel).
        out = pl.pallas_call(
            _eca_scale_kernel,
            out_shape=jax.ShapeDtypeStruct((B, Cp, HWp), x_nchw.dtype),
            grid=(B, num_t),
            in_specs=[pl.BlockSpec((1, Cp, 1), lambda b, t: (b, 0, 0)),
                      pl.BlockSpec((1, Cp, T), lambda b, t: (b, 0, t))],
            out_specs=pl.BlockSpec((1, Cp, T), lambda b, t: (b, 0, t)),
            compiler_params=pltpu.CompilerParams(
                dimension_semantics=("parallel", "parallel"),
                vmem_limit_bytes=limit),
            cost_estimate=pl.CostEstimate(
                flops=B * Cp * HWp,
                bytes_accessed=2 * B * Cp * HWp * itemsize,
                transcendentals=0),
        )(att, xf)

    if (Cp, HWp) != (C, HW):
        out = out[:, :C, :HW]
    return out.reshape(B, C, H, W)


# ---------------------------------------------------------------------------
# Pure-JAX reference (mirrors the PyTorch module) for correctness checking
# ---------------------------------------------------------------------------
def eca_reference(x, taps):
    B, C, H, W = x.shape
    k = taps.shape[0]
    p = (k - 1) // 2
    y = jnp.mean(x, axis=(2, 3))                           # (B, C)
    yp = jnp.pad(y, ((0, 0), (p, p)))
    conv = sum(taps[j] * yp[:, j:j + C] for j in range(k))
    a = jax.nn.sigmoid(conv)[:, :, None, None]
    return x * a


if __name__ == "__main__":
    key = jax.random.PRNGKey(0)
    kx, kw, k2, k3, k4 = jax.random.split(key, 5)

    # Primary shape: B=2, C=64, 16x16 -> fused resident-block, lane-dense path.
    B, C, H, W = 2, 64, 16, 16
    ks = eca_kernel_size(C)                                # = 3 for 64 channels
    x = jax.random.normal(kx, (B, C, H, W), jnp.float32)
    taps = jax.random.normal(kw, (ks,), jnp.float32) * (1.0 / math.sqrt(ks))

    out = jax.block_until_ready(jax.jit(eca_block)(x, taps))
    ref = eca_reference(x, taps)
    assert out.shape == ref.shape, (out.shape, ref.shape)
    assert jnp.all(jnp.isfinite(out))
    err = float(jnp.max(jnp.abs(out - ref)))
    assert jnp.allclose(out, ref, atol=1e-5, rtol=1e-5), err

    # Lane-padding path: HW = 100 -> padded to 128 (pool divides by true HW).
    x2 = jax.random.normal(k2, (2, 32, 10, 10), jnp.float32)
    t2 = jax.random.normal(kw, (eca_kernel_size(32),), jnp.float32) * 0.5
    o2 = jax.block_until_ready(jax.jit(eca_block)(x2, t2))
    assert jnp.allclose(o2, eca_reference(x2, t2), atol=1e-5, rtol=1e-5)

    # Channel-padding path (C = 20 -> 24 sublanes) and B = 1.
    x3 = jax.random.normal(k3, (1, 20, 12, 12), jnp.float32)
    t3 = jax.random.normal(kw, (eca_kernel_size(20),), jnp.float32) * 0.5
    o3 = jax.block_until_ready(jax.jit(eca_block)(x3, t3))
    assert jnp.allclose(o3, eca_reference(x3, t3), atol=1e-5, rtol=1e-5)

    # Tiled two-pass path, forced via a tiny fused-bytes threshold.
    x4 = jax.random.normal(k4, (2, 16, 32, 32), jnp.float32)
    t4 = jax.random.normal(kw, (eca_kernel_size(16),), jnp.float32) * 0.5
    tiled_fn = jax.jit(functools.partial(eca_block, max_fused_bytes=0, tile_lanes=256))
    o4 = jax.block_until_ready(tiled_fn(x4, t4))
    assert jnp.allclose(o4, eca_reference(x4, t4), atol=1e-5, rtol=1e-5)

    print("KERNEL_OK")
</pallas_src>

<mosaic_0001>
module attributes {stable_mosaic.version = 11 : i64} {
  func.func @_eca_fused_kernel(%arg0: i32, %arg1: memref<3xf32, #tpu.memory_space<smem>>, %arg2: memref<1x64x256xf32, #tpu.memory_space<vmem>>, %arg3: memref<1x64x256xf32, #tpu.memory_space<vmem>>) attributes {dimension_semantics = [#tpu.dimension_semantics<parallel>], iteration_bounds = array<i64: 2>, scalar_prefetch = 0 : i64, scratch_operands = 0 : i64, tpu.core_type = #tpu.core_type<tc>, window_params = [{transform_indices = @transform_0, window_bounds = array<i64: 3>}, {transform_indices = @transform_1, window_bounds = array<i64: 1, 64, 256>}, {transform_indices = @transform_2, window_bounds = array<i64: 1, 64, 256>}]} {
    %c0 = arith.constant 0 : index
    %c0_0 = arith.constant 0 : index
    %c0_1 = arith.constant 0 : index
    %0 = vector.load %arg2[%c0, %c0_0, %c0_1] : memref<1x64x256xf32, #tpu.memory_space<vmem>>, vector<1x64x256xf32>
    %1 = vector.shape_cast %0 : vector<1x64x256xf32> to vector<64x256xf32>
    %cst = arith.constant dense<0.000000e+00> : vector<64xf32>
    %2 = vector.multi_reduction <add>, %1, %cst [1] : vector<64x256xf32> to vector<64xf32>
    %3 = vector.shape_cast %2 : vector<64xf32> to vector<64x1xf32>
    %cst_2 = arith.constant 3.906250e-03 : f32
    %4 = vector.broadcast %cst_2 : f32 to vector<64x1xf32>
    %5 = arith.mulf %3, %4 : vector<64x1xf32>
    %6 = tpu.iota {dimensions = array<i32: 0>} : vector<64x1xi32>
    %cst_3 = arith.constant 0.000000e+00 : f32
    %7 = vector.broadcast %cst_3 : f32 to vector<64x1xf32>
    %c1_i32 = arith.constant 1 : i32
    %8 = tpu.dynamic_rotate %5 by %c1_i32 dim 0 : vector<64x1xf32>, i32 -> vector<64x1xf32>
    %c-1_i32 = arith.constant -1 : i32
    %9 = vector.broadcast %c-1_i32 : i32 to vector<64x1xi32>
    %10 = arith.addi %6, %9 : vector<64x1xi32>
    %c0_i32 = arith.constant 0 : i32
    %11 = vector.broadcast %c0_i32 : i32 to vector<64x1xi32>
    %12 = arith.cmpi sge, %10, %11 : vector<64x1xi32>
    %c-1_i32_4 = arith.constant -1 : i32
    %13 = vector.broadcast %c-1_i32_4 : i32 to vector<64x1xi32>
    %14 = arith.addi %6, %13 : vector<64x1xi32>
    %c64_i32 = arith.constant 64 : i32
    %15 = vector.broadcast %c64_i32 : i32 to vector<64x1xi32>
    %16 = arith.cmpi slt, %14, %15 : vector<64x1xi32>
    %17 = arith.andi %12, %16 : vector<64x1xi1>
    %c0_5 = arith.constant 0 : index
    %18 = memref.load %arg1[%c0_5] : memref<3xf32, #tpu.memory_space<smem>>
    %cst_6 = arith.constant 0.000000e+00 : f32
    %19 = vector.broadcast %cst_6 : f32 to vector<64x1xf32>
    %20 = arith.select %17, %8, %19 : vector<64x1xi1>, vector<64x1xf32>
    %21 = vector.broadcast %18 : f32 to vector<64x1xf32>
    %22 = arith.mulf %21, %20 : vector<64x1xf32>
    %23 = arith.addf %7, %22 : vector<64x1xf32>
    %c0_i32_7 = arith.constant 0 : i32
    %24 = vector.broadcast %c0_i32_7 : i32 to vector<64x1xi32>
    %25 = arith.addi %6, %24 : vector<64x1xi32>
    %c0_i32_8 = arith.constant 0 : i32
    %26 = vector.broadcast %c0_i32_8 : i32 to vector<64x1xi32>
    %27 = arith.cmpi sge, %25, %26 : vector<64x1xi32>
    %c0_i32_9 = arith.constant 0 : i32
    %28 = vector.broadcast %c0_i32_9 : i32 to vector<64x1xi32>
    %29 = arith.addi %6, %28 : vector<64x1xi32>
    %c64_i32_10 = arith.constant 64 : i32
    %30 = vector.broadcast %c64_i32_10 : i32 to vector<64x1xi32>
    %31 = arith.cmpi slt, %29, %30 : vector<64x1xi32>
    %32 = arith.andi %27, %31 : vector<64x1xi1>
    %c1 = arith.constant 1 : index
    %33 = memref.load %arg1[%c1] : memref<3xf32, #tpu.memory_space<smem>>
    %cst_11 = arith.constant 0.000000e+00 : f32
    %34 = vector.broadcast %cst_11 : f32 to vector<64x1xf32>
    %35 = arith.select %32, %5, %34 : vector<64x1xi1>, vector<64x1xf32>
    %36 = vector.broadcast %33 : f32 to vector<64x1xf32>
    %37 = arith.mulf %36, %35 : vector<64x1xf32>
    %38 = arith.addf %23, %37 : vector<64x1xf32>
    %c63_i32 = arith.constant 63 : i32
    %39 = tpu.dynamic_rotate %5 by %c63_i32 dim 0 : vector<64x1xf32>, i32 -> vector<64x1xf32>
    %c1_i32_12 = arith.constant 1 : i32
    %40 = vector.broadcast %c1_i32_12 : i32 to vector<64x1xi32>
    %41 = arith.addi %6, %40 : vector<64x1xi32>
    %c0_i32_13 = arith.constant 0 : i32
    %42 = vector.broadcast %c0_i32_13 : i32 to vector<64x1xi32>
    %43 = arith.cmpi sge, %41, %42 : vector<64x1xi32>
    %c1_i32_14 = arith.constant 1 : i32
    %44 = vector.broadcast %c1_i32_14 : i32 to vector<64x1xi32>
    %45 = arith.addi %6, %44 : vector<64x1xi32>
    %c64_i32_15 = arith.constant 64 : i32
    %46 = vector.broadcast %c64_i32_15 : i32 to vector<64x1xi32>
    %47 = arith.cmpi slt, %45, %46 : vector<64x1xi32>
    %48 = arith.andi %43, %47 : vector<64x1xi1>
    %c2 = arith.constant 2 : index
    %49 = memref.load %arg1[%c2] : memref<3xf32, #tpu.memory_space<smem>>
    %cst_16 = arith.constant 0.000000e+00 : f32
    %50 = vector.broadcast %cst_16 : f32 to vector<64x1xf32>
    %51 = arith.select %48, %39, %50 : vector<64x1xi1>, vector<64x1xf32>
    %52 = vector.broadcast %49 : f32 to vector<64x1xf32>
    %53 = arith.mulf %52, %51 : vector<64x1xf32>
    %54 = arith.addf %38, %53 : vector<64x1xf32>
    %55 = arith.negf %54 : vector<64x1xf32>
    %56 = math.exp %55 : vector<64x1xf32>
    %cst_17 = arith.constant 1.000000e+00 : f32
    %57 = vector.broadcast %cst_17 : f32 to vector<64x1xf32>
    %58 = arith.addf %57, %56 : vector<64x1xf32>
    %59 = arith.divf %57, %58 : vector<64x1xf32>
    %60 = vector.broadcast %59 : vector<64x1xf32> to vector<64x256xf32>
    %61 = arith.mulf %1, %60 : vector<64x256xf32>
    %c0_18 = arith.constant 0 : index
    %c0_19 = arith.constant 0 : index
    %c0_20 = arith.constant 0 : index
    %62 = vector.load %arg3[%c0_18, %c0_19, %c0_20] : memref<1x64x256xf32, #tpu.memory_space<vmem>>, vector<1x64x256xf32>
    %63 = vector.shape_cast %62 : vector<1x64x256xf32> to vector<64x256xf32>
    %64 = vector.shape_cast %61 : vector<64x256xf32> to vector<1x64x256xf32>
    tpu.vector_store %arg3[%c0_18, %c0_19, %c0_20], %64 {strides = array<i32>} : memref<1x64x256xf32, #tpu.memory_space<vmem>>, vector<1x64x256xf32>,
    return
  }
  func.func @transform_0(%arg0: i32) -> i32 {
    %c0_i32 = arith.constant 0 : i32
    %c0_i32_0 = arith.constant 0 : i32
    return %c0_i32 : i32
  }
  func.func @transform_1(%arg0: i32) -> (i32, i32, i32) {
    %c0_i32 = arith.constant 0 : i32
    %c0_i32_0 = arith.constant 0 : i32
    %c0_i32_1 = arith.constant 0 : i32
    return %arg0, %c0_i32, %c0_i32_0 : i32, i32, i32
  }
  func.func @transform_2(%arg0: i32) -> (i32, i32, i32) {
    %c0_i32 = arith.constant 0 : i32
    %c0_i32_0 = arith.constant 0 : i32
    %c0_i32_1 = arith.constant 0 : i32
    return %arg0, %c0_i32, %c0_i32_0 : i32, i32, i32
  }
}

</mosaic_0001>

<llo_original>
// kernel: eca_block.1
$region0: #{eca_block.1}
  #allocation0 [shape = 'u32[]', space=smem, size = 0x4, offset = 0x4, fixed_abs, tag = 'smem constant byte address 0x4 - core index']
  #allocation1 [shape = 'u32[144,128]{1,0:T(1,128)}', space=vmem, size = 0x12000, scoped, tag = 'internal scratch']
  %s0 = inlined_call_operand.vmem [shape: f32[3], index: 0, kind: input, shape index: {}]
  %s1 = inlined_call_operand.vmem [shape: f32[2,64,256], index: 1, kind: input, shape index: {}]
  %s2 = inlined_call_operand.vmem [shape: f32[2,64,256], index: 2, kind: output, shape index: {}]
  %s3 = sld [smem:[#allocation0]]
  $region45: #{eca_block.1} parent=0
    _
  %s5 = ssub.s32 1, %s3
  %s6 = scalar_select 0, %s5, %s3
  $region1: #{eca_block.1} parent=0
    #allocation2 [shape = 'u8[512]{0}', space=smem, size = 0x200, scoped, tag = 'input window, operand 0, single buffered']
    #allocation3 [shape = 's32[2]{0}', space=sflag, size = 0x8, scoped, tag = 'scoped memory for eca_block.1']
    %7 = vsyncpa [#allocation3], 0
    loop: start=0, step=1, limit=4
    $region2: #{eca_block.1} parent=1 // loop_pre_header
      _
    $region3: #{eca_block.1} parent=1 // loop_header
      %s9 = sphi 0, %s13
      %p10 = scmp.ge.s32.totalorder %s9, 4
      %s17 = sphi 0, %s17
      %s19 = sphi 0, %s17
      %s20 = sphi 0, %s19
      %s34 = sphi 0, %s20
      %s40 = sphi 0, %s42
      %s43 = sphi 0, %s40
      %s44 = sphi 0, %s43
      %s60 = sphi 0, %s44
      %s66 = sphi 0, %s68
      %s69 = sphi 0, %s66
      %s70 = sphi 0, %s69
      %s86 = sphi 0, %s70
    $region4: #{eca_block.1} parent=1 // loop_header_branch
      %12 = sbr.rel (%p10) target = $region8
    $region5: #{eca_block.1} parent=1 // loop_body
      %s14 = ssub.s32 %s9, 1
      %s15 = ssub.s32 %s9, 2
      %s16 = sadd.s32 %s9, 1
      %s18 = sadd.s32 %s17, 1
      %p21 = scmp.eq.s32.totalorder %s9, 1
      %p22 = scmp.ne.s32.totalorder %s17, %s19
      %p23 = scmp.eq.s32.totalorder %s9, 0
      %p24 = por %p22, %p23
      %p25 = scmp.ne.s32.totalorder %s17, %s19
      %p26 = scmp.eq.s32.totalorder %s14, 1
      %p27 = por %p25, %p26
      %p28 = scmp.ne.s32.totalorder %s19, %s20
      %p29 = scmp.eq.s32.totalorder %s14, 0
      %p30 = por %p28, %p29
      %p31 = scmp.ne.s32.totalorder %s19, %s20
      %p32 = scmp.eq.s32.totalorder %s15, 1
      %p33 = por %p31, %p32
      %p35 = scmp.ne.s32.totalorder %s20, %s34
      %p36 = scmp.eq.s32.totalorder %s15, 0
      %p37 = por %p35, %p36
      %s38 = ssub.s32 %s9, %s16
      %p39 = scmp.eq.s32.totalorder %s38, 0
      %s41 = sadd.s32 %s40, 1
      %s42 = scalar_select %p39, %s40, %s41
      %p45 = pneg %p39
      %p46 = scmp.eq.s32.totalorder %s9, 1
      %p47 = por %p45, %p46
      %p48 = scmp.ne.s32.totalorder %s40, %s43
      %p49 = scmp.eq.s32.totalorder %s9, 0
      %p50 = por %p48, %p49
      %p51 = scmp.ne.s32.totalorder %s40, %s43
      %p52 = scmp.eq.s32.totalorder %s14, 1
      %p53 = por %p51, %p52
      %p54 = scmp.ne.s32.totalorder %s43, %s44
      %p55 = scmp.eq.s32.totalorder %s14, 0
      %p56 = por %p54, %p55
      %p57 = scmp.ne.s32.totalorder %s43, %s44
      %p58 = scmp.eq.s32.totalorder %s15, 1
      %p59 = por %p57, %p58
      %p61 = scmp.ne.s32.totalorder %s44, %s60
      %p62 = scmp.eq.s32.totalorder %s15, 0
      %p63 = por %p61, %p62
      %s64 = ssub.s32 %s9, %s16
      %p65 = scmp.eq.s32.totalorder %s64, 0
      %s67 = sadd.s32 %s66, 1
      %s68 = scalar_select %p65, %s66, %s67
      %p71 = pneg %p65
      %p72 = scmp.eq.s32.totalorder %s9, 1
      %p73 = por %p71, %p72
      %p74 = scmp.ne.s32.totalorder %s66, %s69
      %p75 = scmp.eq.s32.totalorder %s9, 0
      %p76 = por %p74, %p75
      %p77 = scmp.ne.s32.totalorder %s66, %s69
      %p78 = scmp.eq.s32.totalorder %s14, 1
      %p79 = por %p77, %p78
      %p80 = scmp.ne.s32.totalorder %s69, %s70
      %p81 = scmp.eq.s32.totalorder %s14, 0
      %p82 = por %p80, %p81
      %p83 = scmp.ne.s32.totalorder %s69, %s70
      %p84 = scmp.eq.s32.totalorder %s15, 1
      %p85 = por %p83, %p84
      %p87 = scmp.ne.s32.totalorder %s70, %s86
      %p88 = scmp.eq.s32.totalorder %s15, 0
      %p89 = por %p87, %p88
      %p90 = scmp.le.s32.totalorder 1, %s9
      %p91 = scmp.lt.s32.totalorder %s9, 3
      %p92 = pnand %p90, %p91
      %p93 = pneg %p92
      // Predicated region
      $region9: #{eca_block.1} parent=5 // pred_check
        _
      $region10: #{eca_block.1} parent=5 // pred_check_branch
        %95 = sbr.rel (%p92) target = $region12
      $region11: #{eca_block.1} parent=5 // pred_region
        %s96 = ssub.s32 %s9, 1
        // Predicated region
        $region13: #{eca_block.1} parent=11 // pred_check
          %p97 = pneg %p30
        $region14: #{eca_block.1} parent=11 // pred_check_branch
          %99 = sbr.rel (%p97) target = $region16
        $region15: #{eca_block.1} parent=11 // pred_region
          %s101 = ssub.s32 16, 16
          %102 = vsyncadd [#allocation3], %s101
          %s104 = sshll.u32 %s0, 4
          %s105 = int_to_ptr.vmem [resolvable:$true] %s104
          %107 = dma.vmem_to_smem %s105, 16, [#allocation2], [#allocation3]
        $region16: #{eca_block.1} parent=11 // pred_fallthru
          _
      $region12: #{eca_block.1} parent=5 // pred_fallthru
        _
      %p108 = scmp.lt.s32.totalorder %s9, 2
      // Predicated region
      $region17: #{eca_block.1} parent=5 // pred_check
        %p109 = pneg %p108
      $region18: #{eca_block.1} parent=5 // pred_check_branch
        %111 = sbr.rel (%p109) target = $region20
      $region19: #{eca_block.1} parent=5 // pred_region
        // Predicated region
        $region21: #{eca_block.1} parent=19 // pred_check
          %p112 = pneg %p50
        $region22: #{eca_block.1} parent=19 // pred_check_branch
          %114 = sbr.rel (%p112) target = $region24
        $region23: #{eca_block.1} parent=19 // pred_region
          %p115 = scmp.lt.s32.totalorder %s9, 1
          %s116 = scalar_select %p115, %s9, 1
          %s117 = smul.addr %s116, 16
          %s118 = smul.addr %s117, 8
          %s119 = scalar_lea.vmem %s1, %s118
        $region24: #{eca_block.1} parent=19 // pred_fallthru
          _
      $region20: #{eca_block.1} parent=5 // pred_fallthru
        _
      %p120 = scmp.le.s32.totalorder 1, %s9
      %p121 = scmp.lt.s32.totalorder %s9, 3
      %p122 = pnand %p120, %p121
      %p123 = pneg %p122
      // Predicated region
      $region25: #{eca_block.1} parent=5 // pred_check
        _
      $region26: #{eca_block.1} parent=5 // pred_check_branch
        %125 = sbr.rel (%p122) target = $region28
      $region27: #{eca_block.1} parent=5 // pred_region
        %s126 = ssub.s32 %s9, 1
        // Predicated region
        $region29: #{eca_block.1} parent=27 // pred_check
          %p127 = pneg %p30
        $region30: #{eca_block.1} parent=27 // pred_check_branch
          %129 = sbr.rel (%p127) target = $region32
        $region31: #{eca_block.1} parent=27 // pred_region
          %130 = dma.done [#allocation3], 16
        $region32: #{eca_block.1} parent=27 // pred_fallthru
          _
        %131 = sfence
        %p132 = pneg %p30
        %p133 = pneg %p27
        %p134 = scmp.lt.s32.totalorder %s14, 1
        %s135 = scalar_select %p134, %s14, 1
        %s136 = smul.addr %s135, 16
        %s137 = smul.addr %s136, 8
        %s138 = scalar_lea.vmem %s1, %s137
        %p139 = pneg %p56
        %p140 = pneg %p53
        %p141 = pneg %p82
        %p142 = pneg %p79
        %p143 = scmp.lt.s32.totalorder %s14, 1
        %s144 = scalar_select %p143, %s14, 1
        %s145 = smul.addr %s144, 16
        %s146 = smul.addr %s145, 8
        %s147 = scalar_lea.vmem %s2, %s146
        %p148 = scmp.lt.s32.totalorder %s14, 1
        %s149 = scalar_select %p148, %s14, 1
        %s150 = smul.addr %s149, 16
        %s151 = smul.addr %s150, 8
        %s152 = scalar_lea.vmem %s1, %s151
        %p153 = scmp.lt.s32.totalorder %s14, 1
        %s154 = scalar_select %p153, %s14, 1
        %s155 = smul.addr %s154, 16
        %s156 = smul.addr %s155, 8
        %s157 = scalar_lea.vmem %s2, %s156
        %v158 = vld [vmem:[%s152] sm:$0xff]
        %v159 = vld [vmem:[%s152 + $0x8] sm:$0xff]
        %v160 = vld [vmem:[%s152 + $0x10] sm:$0xff]
        %v161 = vld [vmem:[%s152 + $0x18] sm:$0xff]
        %v162 = vld [vmem:[%s152 + $0x20] sm:$0xff]
        %v163 = vld [vmem:[%s152 + $0x28] sm:$0xff]
        %v164 = vld [vmem:[%s152 + $0x30] sm:$0xff]
        %v165 = vld [vmem:[%s152 + $0x38] sm:$0xff]
        %v166 = vld [vmem:[%s152 + $0x40] sm:$0xff]
        %v167 = vld [vmem:[%s152 + $0x48] sm:$0xff]
        %v168 = vld [vmem:[%s152 + $0x50] sm:$0xff]
        %v169 = vld [vmem:[%s152 + $0x58] sm:$0xff]
        %v170 = vld [vmem:[%s152 + $0x60] sm:$0xff]
        %v171 = vld [vmem:[%s152 + $0x68] sm:$0xff]
        %v172 = vld [vmem:[%s152 + $0x70] sm:$0xff]
        %v173 = vld [vmem:[%s152 + $0x78] sm:$0xff]
        %v174 = vadd.f32 %v158, %v159
        %175 = vadd.xlane.f32.xlu0 %v174
        %v176 = vpop.xlane.xlu0 %175
        %v177 = vadd.f32 %v160, %v161
        %178 = vadd.xlane.f32.xlu0 %v177
        %v179 = vpop.xlane.xlu0 %178
        %v180 = vadd.f32 %v162, %v163
        %181 = vadd.xlane.f32.xlu0 %v180
        %v182 = vpop.xlane.xlu0 %181
        %v183 = vadd.f32 %v164, %v165
        %184 = vadd.xlane.f32.xlu0 %v183
        %v185 = vpop.xlane.xlu0 %184
        %v186 = vadd.f32 %v166, %v167
        %187 = vadd.xlane.f32.xlu0 %v186
        %v188 = vpop.xlane.xlu0 %187
        %v189 = vadd.f32 %v168, %v169
        %190 = vadd.xlane.f32.xlu0 %v189
        %v191 = vpop.xlane.xlu0 %190
        %v192 = vadd.f32 %v170, %v171
        %193 = vadd.xlane.f32.xlu0 %v192
        %v194 = vpop.xlane.xlu0 %193
        %v195 = vadd.f32 %v172, %v173
        %196 = vadd.xlane.f32.xlu0 %v195
        %v197 = vpop.xlane.xlu0 %196
        %v198 = vmul.f32 %v176, 0.00390625
        %v199 = vmul.f32 %v179, 0.00390625
        %v200 = vmul.f32 %v182, 0.00390625
        %v201 = vmul.f32 %v185, 0.00390625
        %v202 = vmul.f32 %v188, 0.00390625
        %v203 = vmul.f32 %v191, 0.00390625
        %v204 = vmul.f32 %v194, 0.00390625
        %v205 = vmul.f32 %v197, 0.00390625
        %v206 = vlaneseq
        %v207 = vshrl.u32 %v206, 7
        %v208 = vadd.s32 %v207, 8
        %v209 = vadd.s32 %v207, 16
        %v210 = vadd.s32 %v207, 24
        %v211 = vadd.s32 %v207, 32
        %v212 = vadd.s32 %v207, 40
        %v213 = vadd.s32 %v207, 48
        %v214 = vadd.s32 %v207, 56
        %v215 = vrot.slane %v198, 7
        %v216 = vrot.slane %v199, 7
        %v217 = vrot.slane %v200, 7
        %v218 = vrot.slane %v201, 7
        %v219 = vrot.slane %v202, 7
        %v220 = vrot.slane %v203, 7
        %v221 = vrot.slane %v204, 7
        %v222 = vrot.slane %v205, 7
        %vm223 = vcmp.lt.s32.totalorder %v207, 1
        %v224 = vsel %vm223, %v221, %v222
        %v225 = vsel %vm223, %v220, %v221
        %v226 = vsel %vm223, %v219, %v220
        %v227 = vsel %vm223, %v218, %v219
        %v228 = vsel %vm223, %v217, %v218
        %v229 = vsel %vm223, %v216, %v217
        %v230 = vsel %vm223, %v215, %v216
        %v231 = vsel %vm223, %v222, %v215
        %v232 = vadd.s32 %v207, 4294967295
        %v233 = vadd.s32 %v208, 4294967295
        %v234 = vadd.s32 %v209, 4294967295
        %v235 = vadd.s32 %v210, 4294967295
        %v236 = vadd.s32 %v211, 4294967295
        %v237 = vadd.s32 %v212, 4294967295
        %v238 = vadd.s32 %v213, 4294967295
        %v239 = vadd.s32 %v214, 4294967295
        %vm240 = vcmp.ge.s32.totalorder %v232, 0
        %vm241 = vcmp.ge.s32.totalorder %v233, 0
        %vm242 = vcmp.ge.s32.totalorder %v234, 0
        %vm243 = vcmp.ge.s32.totalorder %v235, 0
        %vm244 = vcmp.ge.s32.totalorder %v236, 0
        %vm245 = vcmp.ge.s32.totalorder %v237, 0
        %vm246 = vcmp.ge.s32.totalorder %v238, 0
        %vm247 = vcmp.ge.s32.totalorder %v239, 0
        %vm248 = vcmp.lt.s32.totalorder %v232, 64
        %vm249 = vcmp.lt.s32.totalorder %v233, 64
        %vm250 = vcmp.lt.s32.totalorder %v234, 64
        %vm251 = vcmp.lt.s32.totalorder %v235, 64
        %vm252 = vcmp.lt.s32.totalorder %v236, 64
        %vm253 = vcmp.lt.s32.totalorder %v237, 64
        %vm254 = vcmp.lt.s32.totalorder %v238, 64
        %vm255 = vcmp.lt.s32.totalorder %v239, 64
        %vm256 = vmand %vm240, %vm248
        %vm257 = vmand %vm241, %vm249
        %vm258 = vmand %vm242, %vm250
        %vm259 = vmand %vm243, %vm251
        %vm260 = vmand %vm244, %vm252
        %vm261 = vmand %vm245, %vm253
        %vm262 = vmand %vm246, %vm254
        %vm263 = vmand %vm247, %vm255
        %s264 = sld [smem:[#allocation2]]
        %v265 = vsel %vm256, %v231, 0.0
        %v266 = vsel %vm257, %v230, 0.0
        %v267 = vsel %vm258, %v229, 0.0
        %v268 = vsel %vm259, %v228, 0.0
        %v269 = vsel %vm260, %v227, 0.0
        %v270 = vsel %vm261, %v226, 0.0
        %v271 = vsel %vm262, %v225, 0.0
        %v272 = vsel %vm263, %v224, 0.0
        %v273 = vstv %s264
        %v274 = vmul.f32 %v273, %v265
        %v275 = vmul.f32 %v273, %v266
        %v276 = vmul.f32 %v273, %v267
        %v277 = vmul.f32 %v273, %v268
        %v278 = vmul.f32 %v273, %v269
        %v279 = vmul.f32 %v273, %v270
        %v280 = vmul.f32 %v273, %v271
        %v281 = vmul.f32 %v273, %v272
        %v282 = vadd.f32 %v274, 0.0
        %v283 = vadd.f32 %v275, 0.0
        %v284 = vadd.f32 %v276, 0.0
        %v285 = vadd.f32 %v277, 0.0
        %v286 = vadd.f32 %v278, 0.0
        %v287 = vadd.f32 %v279, 0.0
        %v288 = vadd.f32 %v280, 0.0
        %v289 = vadd.f32 %v281, 0.0
        %vm290 = vcmp.ge.s32.totalorder %v207, 0
        %vm291 = vcmp.ge.s32.totalorder %v208, 0
        %vm292 = vcmp.ge.s32.totalorder %v209, 0
        %vm293 = vcmp.ge.s32.totalorder %v210, 0
        %vm294 = vcmp.ge.s32.totalorder %v211, 0
        %vm295 = vcmp.ge.s32.totalorder %v212, 0
        %vm296 = vcmp.ge.s32.totalorder %v213, 0
        %vm297 = vcmp.ge.s32.totalorder %v214, 0
        %vm298 = vcmp.lt.s32.totalorder %v207, 64
        %vm299 = vcmp.lt.s32.totalorder %v208, 64
        %vm300 = vcmp.lt.s32.totalorder %v209, 64
        %vm301 = vcmp.lt.s32.totalorder %v210, 64
        %vm302 = vcmp.lt.s32.totalorder %v211, 64
        %vm303 = vcmp.lt.s32.totalorder %v212, 64
        %vm304 = vcmp.lt.s32.totalorder %v213, 64
        %vm305 = vcmp.lt.s32.totalorder %v214, 64
        %vm306 = vmand %vm290, %vm298
        %vm307 = vmand %vm291, %vm299
        %vm308 = vmand %vm292, %vm300
        %vm309 = vmand %vm293, %vm301
        %vm310 = vmand %vm294, %vm302
        %vm311 = vmand %vm295, %vm303
        %vm312 = vmand %vm296, %vm304
        %vm313 = vmand %vm297, %vm305
        %s314 = sld [smem:[#allocation2 + $0x1]]
        %v315 = vsel %vm306, %v198, 0.0
        %v316 = vsel %vm307, %v199, 0.0
        %v317 = vsel %vm308, %v200, 0.0
        %v318 = vsel %vm309, %v201, 0.0
        %v319 = vsel %vm310, %v202, 0.0
        %v320 = vsel %vm311, %v203, 0.0
        %v321 = vsel %vm312, %v204, 0.0
        %v322 = vsel %vm313, %v205, 0.0
        %v323 = vstv %s314
        %v324 = vmul.f32 %v323, %v315
        %v325 = vmul.f32 %v323, %v316
        %v326 = vmul.f32 %v323, %v317
        %v327 = vmul.f32 %v323, %v318
        %v328 = vmul.f32 %v323, %v319
        %v329 = vmul.f32 %v323, %v320
        %v330 = vmul.f32 %v323, %v321
        %v331 = vmul.f32 %v323, %v322
        %v332 = vadd.f32 %v282, %v324
        %v333 = vadd.f32 %v283, %v325
        %v334 = vadd.f32 %v284, %v326
        %v335 = vadd.f32 %v285, %v327
        %v336 = vadd.f32 %v286, %v328
        %v337 = vadd.f32 %v287, %v329
        %v338 = vadd.f32 %v288, %v330
        %v339 = vadd.f32 %v289, %v331
        %v340 = vrot.slane %v198, 1
        %v341 = vrot.slane %v199, 1
        %v342 = vrot.slane %v200, 1
        %v343 = vrot.slane %v201, 1
        %v344 = vrot.slane %v202, 1
        %v345 = vrot.slane %v203, 1
        %v346 = vrot.slane %v204, 1
        %v347 = vrot.slane %v205, 1
        %vm348 = vcmp.lt.s32.totalorder %v207, 7
        %v349 = vsel %vm348, %v346, %v347
        %v350 = vsel %vm348, %v345, %v346
        %v351 = vsel %vm348, %v344, %v345
        %v352 = vsel %vm348, %v343, %v344
        %v353 = vsel %vm348, %v342, %v343
        %v354 = vsel %vm348, %v341, %v342
        %v355 = vsel %vm348, %v340, %v341
        %v356 = vsel %vm348, %v347, %v340
        %v357 = vadd.s32 %v207, 1
        %v358 = vadd.s32 %v208, 1
        %v359 = vadd.s32 %v209, 1
        %v360 = vadd.s32 %v210, 1
        %v361 = vadd.s32 %v211, 1
        %v362 = vadd.s32 %v212, 1
        %v363 = vadd.s32 %v213, 1
        %v364 = vadd.s32 %v214, 1
        %vm365 = vcmp.ge.s32.totalorder %v357, 0
        %vm366 = vcmp.ge.s32.totalorder %v358, 0
        %vm367 = vcmp.ge.s32.totalorder %v359, 0
        %vm368 = vcmp.ge.s32.totalorder %v360, 0
        %vm369 = vcmp.ge.s32.totalorder %v361, 0
        %vm370 = vcmp.ge.s32.totalorder %v362, 0
        %vm371 = vcmp.ge.s32.totalorder %v363, 0
        %vm372 = vcmp.ge.s32.totalorder %v364, 0
        %vm373 = vcmp.lt.s32.totalorder %v357, 64
        %vm374 = vcmp.lt.s32.totalorder %v358, 64
        %vm375 = vcmp.lt.s32.totalorder %v359, 64
        %vm376 = vcmp.lt.s32.totalorder %v360, 64
        %vm377 = vcmp.lt.s32.totalorder %v361, 64
        %vm378 = vcmp.lt.s32.totalorder %v362, 64
        %vm379 = vcmp.lt.s32.totalorder %v363, 64
        %vm380 = vcmp.lt.s32.totalorder %v364, 64
        %vm381 = vmand %vm365, %vm373
        %vm382 = vmand %vm366, %vm374
        %vm383 = vmand %vm367, %vm375
        %vm384 = vmand %vm368, %vm376
        %vm385 = vmand %vm369, %vm377
        %vm386 = vmand %vm370, %vm378
        %vm387 = vmand %vm371, %vm379
        %vm388 = vmand %vm372, %vm380
        %s389 = sld [smem:[#allocation2 + $0x2]]
        %v390 = vsel %vm381, %v355, 0.0
        %v391 = vsel %vm382, %v354, 0.0
        %v392 = vsel %vm383, %v353, 0.0
        %v393 = vsel %vm384, %v352, 0.0
        %v394 = vsel %vm385, %v351, 0.0
        %v395 = vsel %vm386, %v350, 0.0
        %v396 = vsel %vm387, %v349, 0.0
        %v397 = vsel %vm388, %v356, 0.0
        %v398 = vstv %s389
        %v399 = vmul.f32 %v398, %v390
        %v400 = vmul.f32 %v398, %v391
        %v401 = vmul.f32 %v398, %v392
        %v402 = vmul.f32 %v398, %v393
        %v403 = vmul.f32 %v398, %v394
        %v404 = vmul.f32 %v398, %v395
        %v405 = vmul.f32 %v398, %v396
        %v406 = vmul.f32 %v398, %v397
        %v407 = vadd.f32 %v332, %v399
        %v408 = vadd.f32 %v333, %v400
        %v409 = vadd.f32 %v334, %v401
        %v410 = vadd.f32 %v335, %v402
        %v411 = vadd.f32 %v336, %v403
        %v412 = vadd.f32 %v337, %v404
        %v413 = vadd.f32 %v338, %v405
        %v414 = vadd.f32 %v339, %v406
        %v415 = vxor.u32 %v407, 2147483648
        %v416 = vxor.u32 %v408, 2147483648
        %v417 = vxor.u32 %v409, 2147483648
        %v418 = vxor.u32 %v410, 2147483648
        %v419 = vxor.u32 %v411, 2147483648
        %v420 = vxor.u32 %v412, 2147483648
        %v421 = vxor.u32 %v413, 2147483648
        %v422 = vxor.u32 %v414, 2147483648
        %v423 = vmul.f32 %v415, 1.442695
        %v424 = vpow.pop %v423
        %v425 = vmul.f32 %v416, 1.442695
        %v426 = vpow.pop %v425
        %v427 = vmul.f32 %v417, 1.442695
        %v428 = vpow.pop %v427
        %v429 = vmul.f32 %v418, 1.442695
        %v430 = vpow.pop %v429
        %v431 = vmul.f32 %v419, 1.442695
        %v432 = vpow.pop %v431
        %v433 = vmul.f32 %v420, 1.442695
        %v434 = vpow.pop %v433
        %v435 = vmul.f32 %v421, 1.442695
        %v436 = vpow.pop %v435
        %v437 = vmul.f32 %v422, 1.442695
        %v438 = vpow.pop %v437
        %v439 = vadd.f32 %v424, 1.0
        %v440 = vadd.f32 %v426, 1.0
        %v441 = vadd.f32 %v428, 1.0
        %v442 = vadd.f32 %v430, 1.0
        %v443 = vadd.f32 %v432, 1.0
        %v444 = vadd.f32 %v434, 1.0
        %v445 = vadd.f32 %v436, 1.0
        %v446 = vadd.f32 %v438, 1.0
        %v447 = vrcp.pop %v439
        %v448 = vmul.f32 1.0, %v447
        %v449 = vrcp.pop %v440
        %v450 = vmul.f32 1.0, %v449
        %v451 = vrcp.pop %v441
        %v452 = vmul.f32 1.0, %v451
        %v453 = vrcp.pop %v442
        %v454 = vmul.f32 1.0, %v453
        %v455 = vrcp.pop %v443
        %v456 = vmul.f32 1.0, %v455
        %v457 = vrcp.pop %v444
        %v458 = vmul.f32 1.0, %v457
        %v459 = vrcp.pop %v445
        %v460 = vmul.f32 1.0, %v459
        %v461 = vrcp.pop %v446
        %v462 = vmul.f32 1.0, %v461
        %464 = vset.pattern.permute.xlu0 0
        %465 = vperm.xlu0 %464, %v448
        %v466 = vpop.permute.xlu0 %465
        %469 = vset.pattern.permute.xlu0 0
        %470 = vperm.xlu0 %469, %v450
        %v471 = vpop.permute.xlu0 %470
        %474 = vset.pattern.permute.xlu0 0
        %475 = vperm.xlu0 %474, %v452
        %v476 = vpop.permute.xlu0 %475
        %479 = vset.pattern.permute.xlu0 0
        %480 = vperm.xlu0 %479, %v454
        %v481 = vpop.permute.xlu0 %480
        %484 = vset.pattern.permute.xlu0 0
        %485 = vperm.xlu0 %484, %v456
        %v486 = vpop.permute.xlu0 %485
        %489 = vset.pattern.permute.xlu0 0
        %490 = vperm.xlu0 %489, %v458
        %v491 = vpop.permute.xlu0 %490
        %494 = vset.pattern.permute.xlu0 0
        %495 = vperm.xlu0 %494, %v460
        %v496 = vpop.permute.xlu0 %495
        %499 = vset.pattern.permute.xlu0 0
        %500 = vperm.xlu0 %499, %v462
        %v501 = vpop.permute.xlu0 %500
        %v503 = vmul.f32 %v158, %v466
        %v504 = vmul.f32 %v159, %v466
        %v505 = vmul.f32 %v160, %v471
        %v506 = vmul.f32 %v161, %v471
        %v507 = vmul.f32 %v162, %v476
        %v508 = vmul.f32 %v163, %v476
        %v509 = vmul.f32 %v164, %v481
        %v510 = vmul.f32 %v165, %v481
        %v511 = vmul.f32 %v166, %v486
        %v512 = vmul.f32 %v167, %v486
        %v513 = vmul.f32 %v168, %v491
        %v514 = vmul.f32 %v169, %v491
        %v515 = vmul.f32 %v170, %v496
        %v516 = vmul.f32 %v171, %v496
        %v517 = vmul.f32 %v172, %v501
        %v518 = vmul.f32 %v173, %v501
        %519 = vst [vmem:[%s157] sm:$0xff] %v503
        %520 = vst [vmem:[%s157 + $0x8] sm:$0xff] %v504
        %521 = vst [vmem:[%s157 + $0x10] sm:$0xff] %v505
        %522 = vst [vmem:[%s157 + $0x18] sm:$0xff] %v506
        %523 = vst [vmem:[%s157 + $0x20] sm:$0xff] %v507
        %524 = vst [vmem:[%s157 + $0x28] sm:$0xff] %v508
        %525 = vst [vmem:[%s157 + $0x30] sm:$0xff] %v509
        %526 = vst [vmem:[%s157 + $0x38] sm:$0xff] %v510
        %527 = vst [vmem:[%s157 + $0x40] sm:$0xff] %v511
        %528 = vst [vmem:[%s157 + $0x48] sm:$0xff] %v512
        %529 = vst [vmem:[%s157 + $0x50] sm:$0xff] %v513
        %530 = vst [vmem:[%s157 + $0x58] sm:$0xff] %v514
        %531 = vst [vmem:[%s157 + $0x60] sm:$0xff] %v515
        %532 = vst [vmem:[%s157 + $0x68] sm:$0xff] %v516
        %533 = vst [vmem:[%s157 + $0x70] sm:$0xff] %v517
        %534 = vst [vmem:[%s157 + $0x78] sm:$0xff] %v518
        %p535 = scmp.lt.s32.totalorder %s14, 1
        %s536 = scalar_select %p535, %s14, 1
        %s537 = smul.addr %s536, 16
        %s538 = smul.addr %s537, 8
        %s539 = scalar_lea.vmem %s2, %s538
        // Predicated region
        $region33: #{eca_block.1} parent=27 // pred_check
          %p540 = pneg %p79
        $region34: #{eca_block.1} parent=27 // pred_check_branch
          %542 = sbr.rel (%p540) target = $region36
        $region35: #{eca_block.1} parent=27 // pred_region
          _
        $region36: #{eca_block.1} parent=27 // pred_fallthru
          _
      $region28: #{eca_block.1} parent=5 // pred_fallthru
        _
      %p543 = scmp.le.s32.totalorder 2, %s9
      // Predicated region
      $region37: #{eca_block.1} parent=5 // pred_check
        %p544 = pneg %p543
      $region38: #{eca_block.1} parent=5 // pred_check_branch
        %546 = sbr.rel (%p544) target = $region40
      $region39: #{eca_block.1} parent=5 // pred_region
        %s547 = ssub.s32 %s9, 2
        // Predicated region
        $region41: #{eca_block.1} parent=39 // pred_check
          %p548 = pneg %p85
        $region42: #{eca_block.1} parent=39 // pred_check_branch
          %550 = sbr.rel (%p548) target = $region44
        $region43: #{eca_block.1} parent=39 // pred_region
          %p551 = scmp.lt.s32.totalorder %s15, 1
          %s552 = scalar_select %p551, %s15, 1
          %s553 = smul.addr %s552, 16
          %s554 = smul.addr %s553, 8
          %s555 = scalar_lea.vmem %s2, %s554
        $region44: #{eca_block.1} parent=39 // pred_fallthru
          _
      $region40: #{eca_block.1} parent=5 // pred_fallthru
        _
    $region6: #{eca_block.1} parent=1 // loop_footer
      %s13 = sadd.s32 1, %s9
    $region7: #{eca_block.1} parent=1 // loop_footer_branch
      %8 = sbr.rel target = $region3
    $region8: #{eca_block.1} parent=1 // loop_exit
      _
    %556 = vsyncpa [#allocation3], 1
    %s557 = scalar_lea.sflag [#allocation3], 1
    %558 = vsyncpa %s557, 1

</llo_original>
